<compile_context>
chip_gen: v7x
topology: tpu7x:2x2x1
jax: 0.10.0
libtpu: 0.0.40
codegen_flags: <defaults>
</compile_context>

<pallas_src>
import math

import jax
import jax.numpy as jnp
from jax.experimental import pallas as pl
from jax.experimental.pallas import tpu as pltpu


def _cls_attn_kernel(x_ref, pos_ref, wv_ref, bv_ref, wks_ref, bks_ref,
                     scls_ref, vcls_ref, expd_ref, o_ref):
    """One grid step: class-token attention context for a block of batch rows."""
    bb, S, D = x_ref.shape
    H = wks_ref.shape[1]
    f32 = jnp.float32
    wdt = wv_ref.dtype

    # Token rows + (position-independent) positional embedding, in matmul dtype.
    hx2 = x_ref[...].reshape(bb * S, D).astype(wdt) + pos_ref[...]          # (bb*S, D)

    # Value projection: the only DxD matmul left in the kernel (f32 accumulation).
    v_x = jnp.dot(hx2, wv_ref[...], preferred_element_type=f32) + bv_ref[...]   # (bb*S, D)

    # Per-head class-token scores: the query row and 1/sqrt(hd) are pre-folded into
    # wks/bks in the wrapper, so scores come straight out of one skinny matmul.
    s_x = jnp.dot(hx2, wks_ref[...], preferred_element_type=f32) + bks_ref[...]  # (bb*S, H)
    s_x = s_x.reshape(bb, S, H)
    s_cls = scls_ref[...]                                                    # (1, H)

    # Numerically stable softmax over the T = 1 + S key rows, per-head width H only.
    m = jnp.maximum(jnp.max(s_x, axis=1, keepdims=True), s_cls)              # (bb, 1, H)
    p_cls = jnp.exp(s_cls - m)                                               # (bb, 1, H)
    p_x = jnp.exp(s_x - m)                                                   # (bb, S, H)
    z = p_cls + jnp.sum(p_x, axis=1, keepdims=True)                          # (bb, 1, H)
    inv_z = pl.reciprocal(z, approx=True)                                    # EUP slot
    p_cls = p_cls * inv_z
    p_x = p_x * inv_z

    # Expand normalized per-head probabilities to D lanes (tiny K=H matmul) and weight V.
    p_xd = jnp.dot(p_x.reshape(bb * S, H).astype(wdt), expd_ref[...],
                   preferred_element_type=f32)                               # (bb*S, D)
    ctx = jnp.sum((p_xd * v_x).reshape(bb, S, D), axis=1)                    # (bb, D)
    p_clsd = jnp.dot(p_cls.reshape(bb, H).astype(wdt), expd_ref[...],
                     preferred_element_type=f32)                             # (bb, D)
    ctx = ctx + p_clsd * vcls_ref[...]

    o_ref[...] = ctx.astype(o_ref.dtype)
    # nn.Dropout(p=0.1) after the attention is identity in eval mode.


def _const_spec(shape):
    """Single-buffered BlockSpec for an operand whose block never changes."""
    n = len(shape)
    return pl.BlockSpec(shape, lambda *_: (0,) * n, pipeline_mode=pl.Buffered(1))


def _pick_block_b(B, cap):
    """Largest batch block that divides B, keeps the output block's sublane dim
    layout-legal (multiple of 8 or == B), fits the VMEM cap, preferring >= 2 grid
    steps so the batch axis pipelines / shards across TensorCores."""
    cap = max(1, min(cap, B))
    best = None
    for bb in range(cap, 0, -1):
        if B % bb or not (bb % 8 == 0 or bb == B):
            continue
        if best is None:
            best = bb
        if bb % 8 == 0 and B // bb >= 2:
            return bb
    return best if best is not None else B


def attention_layer_forward(x, params, num_heads=4, block_b=None,
                            param_dtype=jnp.bfloat16):
    """x: (B, S, D).  Returns (B, D): the attention output at the class token."""
    B, S, D = x.shape
    H = num_heads
    assert D % H == 0
    hd = D // H
    scale = 1.0 / math.sqrt(hd)
    f32 = jnp.float32
    wdt = jnp.dtype(param_dtype)

    # ---- batch-independent class-token path (computed once, outside the kernel) ----
    cls_pos = (params["class_token"] + params["pos_emb"]).reshape(1, D).astype(f32)
    wq_t = params["wq"].T.astype(f32)
    wk_t = params["wk"].T.astype(f32)
    wv_t = params["wv"].T.astype(f32)
    q = cls_pos @ wq_t + params["bq"].astype(f32)              # (1, D) class-token query
    k_cls = cls_pos @ wk_t + params["bk"].astype(f32)          # (1, D)
    v_cls = cls_pos @ wv_t + params["bv"].astype(f32)          # (1, D)

    # Head-expansion matrix: expand_hd[h, d] = 1 iff lane d belongs to head h.
    head_id = jnp.arange(D, dtype=jnp.int32) // hd
    expand_hd = (head_id[None, :] == jnp.arange(H, dtype=jnp.int32)[:, None]).astype(f32)

    # Fold the query and the softmax scale into the key projection so the kernel
    # produces per-head scores directly:  s_x = hx @ wk_score + bk_score  (width H).
    wk_score = (scale * (wk_t * q)) @ expand_hd.T              # (D, H)
    bk_score = (scale * (params["bk"].astype(f32).reshape(1, D) * q)) @ expand_hd.T  # (1, H)
    s_cls = (scale * (k_cls * q)) @ expand_hd.T                # (1, H) class-token self score

    # ---- kernel operands -----------------------------------------------------------
    w_v = wv_t.astype(wdt)
    b_v = params["bv"].reshape(1, D).astype(f32)
    pos = params["pos_emb"].reshape(1, D).astype(wdt)
    wks = wk_score.astype(wdt)
    bks = bk_score.astype(f32)
    scls = s_cls.astype(f32)
    vcls = v_cls.astype(f32)
    expd = expand_hd.astype(wdt)
    # Stream x in the compute dtype (halves HBM traffic on the bf16 path).
    x_in = x if wdt == jnp.dtype(jnp.float32) else x.astype(wdt)

    # ---- VMEM-aware block sizing & scoped-VMEM limit ---------------------------------
    xb = jnp.dtype(x_in.dtype).itemsize
    wb = wdt.itemsize
    const_bytes = (D * D + D * H + H * D + D) * wb + (2 * D + 2 * H) * 4
    # live bytes per batch row: x (double-buffered), cast copy, f32 V, f32 expanded
    # probs, score/prob tensors (width H), output block (double-buffered).
    per_row = S * D * (2 * xb + wb + 8) + 2 * S * H * 4 + 8 * D

    try:
        phys_vmem = int(getattr(pltpu.get_tpu_info(), "vmem_capacity_bytes", 64 << 20))
    except Exception:
        phys_vmem = 64 << 20                     # conservative: v7x per-TensorCore
    budget = (phys_vmem * 3) // 4                # leave headroom for compiler scratch

    if block_b is None:
        act_budget = max(budget - 2 * const_bytes, per_row)
        block_b = _pick_block_b(B, act_budget // per_row)
    assert B % block_b == 0
    grid_b = B // block_b

    est = const_bytes + block_b * per_row
    vmem_limit = int(min(budget, max(32 << 20, 2 * est)))

    ctx = pl.pallas_call(
        _cls_attn_kernel,
        out_shape=jax.ShapeDtypeStruct((B, D), f32),
        grid_spec=pltpu.PrefetchScalarGridSpec(
            num_scalar_prefetch=0,
            grid=(grid_b,),
            in_specs=[
                pl.BlockSpec((block_b, S, D), lambda b: (b, 0, 0)),  # x block
                _const_spec((1, D)),        # pos_emb
                _const_spec((D, D)),        # Wv^T
                _const_spec((1, D)),        # bv
                _const_spec((D, H)),        # folded per-head score weight
                _const_spec((1, H)),        # folded per-head score bias
                _const_spec((1, H)),        # class-token self score
                _const_spec((1, D)),        # class-token value row
                _const_spec((H, D)),        # head -> lanes expansion (0/1)
            ],
            out_specs=pl.BlockSpec((block_b, D), lambda b: (b, 0)),
        ),
        compiler_params=pltpu.CompilerParams(
            dimension_semantics=("parallel",),
            vmem_limit_bytes=vmem_limit),
    )(x_in, pos, w_v, b_v, wks, bks, scls, vcls, expd)

    # Output projection hoisted out of the kernel: one full-batch MXU matmul.
    w_o = params["wo"].T.astype(wdt)
    out = jnp.dot(ctx.astype(wdt), w_o, preferred_element_type=f32) \
        + params["bo"].reshape(1, D).astype(f32)
    return out  # (B, D)


def _reference_forward(x, params, num_heads=4):
    """Pure-JAX reference of the PyTorch forward (eval mode)."""
    B, S, D = x.shape
    hd = D // num_heads
    cls = jnp.broadcast_to(params["class_token"], (B, 1, D))
    h = jnp.concatenate([cls, x], axis=1) + params["pos_emb"]
    q = h @ params["wq"].T + params["bq"]
    k = h @ params["wk"].T + params["bk"]
    v = h @ params["wv"].T + params["bv"]
    T = S + 1
    qh = q.reshape(B, T, num_heads, hd)
    kh = k.reshape(B, T, num_heads, hd)
    vh = v.reshape(B, T, num_heads, hd)
    s = jnp.einsum('bqhd,bkhd->bhqk', qh, kh) / jnp.sqrt(hd)
    p = jax.nn.softmax(s, axis=-1)
    ctx = jnp.einsum('bhqk,bkhd->bqhd', p, vh).reshape(B, T, D)
    out = ctx @ params["wo"].T + params["bo"]
    return out[:, 0]


def _init_params(key, D):
    ks = jax.random.split(key, 10)
    scale = 1.0 / jnp.sqrt(D)
    return {
        "class_token": jax.random.normal(ks[0], (1, 1, D), jnp.float32),
        "pos_emb": jax.random.normal(ks[1], (1, 1, D), jnp.float32),
        "wq": jax.random.normal(ks[2], (D, D), jnp.float32) * scale,
        "wk": jax.random.normal(ks[3], (D, D), jnp.float32) * scale,
        "wv": jax.random.normal(ks[4], (D, D), jnp.float32) * scale,
        "wo": jax.random.normal(ks[5], (D, D), jnp.float32) * scale,
        "bq": jax.random.normal(ks[6], (D,), jnp.float32) * 0.1,
        "bk": jax.random.normal(ks[7], (D,), jnp.float32) * 0.1,
        "bv": jax.random.normal(ks[8], (D,), jnp.float32) * 0.1,
        "bo": jax.random.normal(ks[9], (D,), jnp.float32) * 0.1,
    }


if __name__ == "__main__":
    S, D, H = 8, 32, 4
    key = jax.random.PRNGKey(0)
    kx, kx2, kp = jax.random.split(key, 3)
    params = _init_params(kp, D)

    # Multi-grid-step shape: B=16 -> block_b=8, grid=(2,).
    x = jax.random.normal(kx, (16, S, D), jnp.float32)
    ref = _reference_forward(x, params, num_heads=H)

    # f32 path: tight(ish) check (slack only for the approx softmax reciprocal
    # and the trace-time q/scale folding reassociation).
    out_f32 = attention_layer_forward(x, params, num_heads=H, param_dtype=jnp.float32)
    out_f32 = jax.block_until_ready(out_f32)
    assert out_f32.shape == (16, D)
    assert jnp.allclose(out_f32, ref, atol=1e-2, rtol=1e-2), \
        float(jnp.max(jnp.abs(out_f32 - ref)))

    # bf16-weight / bf16-activation path (production setting): loose sanity check.
    out_bf16 = attention_layer_forward(x, params, num_heads=H, param_dtype=jnp.bfloat16)
    out_bf16 = jax.block_until_ready(out_bf16)
    assert out_bf16.shape == (16, D)
    assert jnp.allclose(out_bf16, ref, atol=2e-1, rtol=2e-1)

    # Tiny-batch path (single grid step, block_b == B == 2).
    x2 = jax.random.normal(kx2, (2, S, D), jnp.float32)
    ref2 = _reference_forward(x2, params, num_heads=H)
    out2 = jax.block_until_ready(
        attention_layer_forward(x2, params, num_heads=H, param_dtype=jnp.float32))
    assert out2.shape == (2, D)
    assert jnp.allclose(out2, ref2, atol=1e-2, rtol=1e-2)

    print("KERNEL_OK")
</pallas_src>

<mosaic_0001>
module attributes {stable_mosaic.version = 11 : i64} {
  func.func @_cls_attn_kernel(%arg0: i32, %arg1: memref<8x8x32xf32, #tpu.memory_space<vmem>>, %arg2: memref<1x32xf32, #tpu.memory_space<vmem>>, %arg3: memref<32x32xf32, #tpu.memory_space<vmem>>, %arg4: memref<1x32xf32, #tpu.memory_space<vmem>>, %arg5: memref<32x4xf32, #tpu.memory_space<vmem>>, %arg6: memref<1x4xf32, #tpu.memory_space<vmem>>, %arg7: memref<1x4xf32, #tpu.memory_space<vmem>>, %arg8: memref<1x32xf32, #tpu.memory_space<vmem>>, %arg9: memref<4x32xf32, #tpu.memory_space<vmem>>, %arg10: memref<8x32xf32, #tpu.memory_space<vmem>>) attributes {dimension_semantics = [#tpu.dimension_semantics<parallel>], iteration_bounds = array<i64: 2>, scalar_prefetch = 0 : i64, scratch_operands = 0 : i64, tpu.core_type = #tpu.core_type<tc>, window_params = [{transform_indices = @transform_0, window_bounds = array<i64: 8, 8, 32>}, {pipeline_mode = #tpu.pipeline_mode<synchronous>, transform_indices = @transform_1, window_bounds = array<i64: 1, 32>}, {pipeline_mode = #tpu.pipeline_mode<synchronous>, transform_indices = @transform_2, window_bounds = array<i64: 32, 32>}, {pipeline_mode = #tpu.pipeline_mode<synchronous>, transform_indices = @transform_3, window_bounds = array<i64: 1, 32>}, {pipeline_mode = #tpu.pipeline_mode<synchronous>, transform_indices = @transform_4, window_bounds = array<i64: 32, 4>}, {pipeline_mode = #tpu.pipeline_mode<synchronous>, transform_indices = @transform_5, window_bounds = array<i64: 1, 4>}, {pipeline_mode = #tpu.pipeline_mode<synchronous>, transform_indices = @transform_6, window_bounds = array<i64: 1, 4>}, {pipeline_mode = #tpu.pipeline_mode<synchronous>, transform_indices = @transform_7, window_bounds = array<i64: 1, 32>}, {pipeline_mode = #tpu.pipeline_mode<synchronous>, transform_indices = @transform_8, window_bounds = array<i64: 4, 32>}, {transform_indices = @transform_9, window_bounds = array<i64: 8, 32>}]} {
    %c0 = arith.constant 0 : index
    %c0_0 = arith.constant 0 : index
    %c0_1 = arith.constant 0 : index
    %0 = vector.load %arg1[%c0, %c0_0, %c0_1] : memref<8x8x32xf32, #tpu.memory_space<vmem>>, vector<8x8x32xf32>
    %1 = vector.shape_cast %0 : vector<8x8x32xf32> to vector<64x32xf32>
    %c0_2 = arith.constant 0 : index
    %c0_3 = arith.constant 0 : index
    %2 = vector.load %arg2[%c0_2, %c0_3] : memref<1x32xf32, #tpu.memory_space<vmem>>, vector<1x32xf32>
    %3 = vector.broadcast %2 : vector<1x32xf32> to vector<64x32xf32>
    %4 = arith.addf %1, %3 : vector<64x32xf32>
    %c0_4 = arith.constant 0 : index
    %c0_5 = arith.constant 0 : index
    %5 = vector.load %arg3[%c0_4, %c0_5] : memref<32x32xf32, #tpu.memory_space<vmem>>, vector<32x32xf32>
    %cst = arith.constant dense<0.000000e+00> : vector<64x32xf32>
    %6 = tpu.matmul %4, %5, %cst {dimension_numbers = #tpu.dot_dimension_numbers<[1], [0], [0], [1], [0, 0, 1, 1], [], []>} : vector<64x32xf32>, vector<32x32xf32>, vector<64x32xf32> -> vector<64x32xf32>
    %c0_6 = arith.constant 0 : index
    %c0_7 = arith.constant 0 : index
    %7 = vector.load %arg4[%c0_6, %c0_7] : memref<1x32xf32, #tpu.memory_space<vmem>>, vector<1x32xf32>
    %8 = vector.broadcast %7 : vector<1x32xf32> to vector<64x32xf32>
    %9 = arith.addf %6, %8 : vector<64x32xf32>
    %c0_8 = arith.constant 0 : index
    %c0_9 = arith.constant 0 : index
    %10 = vector.load %arg5[%c0_8, %c0_9] : memref<32x4xf32, #tpu.memory_space<vmem>>, vector<32x4xf32>
    %cst_10 = arith.constant dense<0.000000e+00> : vector<64x4xf32>
    %11 = tpu.matmul %4, %10, %cst_10 {dimension_numbers = #tpu.dot_dimension_numbers<[1], [0], [0], [1], [0, 0, 1, 1], [], []>} : vector<64x32xf32>, vector<32x4xf32>, vector<64x4xf32> -> vector<64x4xf32>
    %c0_11 = arith.constant 0 : index
    %c0_12 = arith.constant 0 : index
    %12 = vector.load %arg6[%c0_11, %c0_12] : memref<1x4xf32, #tpu.memory_space<vmem>>, vector<1x4xf32>
    %13 = vector.broadcast %12 : vector<1x4xf32> to vector<64x4xf32>
    %14 = arith.addf %11, %13 : vector<64x4xf32>
    %15 = vector.shape_cast %14 : vector<64x4xf32> to vector<8x8x4xf32>
    %c0_13 = arith.constant 0 : index
    %c0_14 = arith.constant 0 : index
    %16 = vector.load %arg7[%c0_13, %c0_14] : memref<1x4xf32, #tpu.memory_space<vmem>>, vector<1x4xf32>
    %cst_15 = arith.constant dense<0xFF800000> : vector<8x4xf32>
    %17 = vector.multi_reduction <maximumf>, %15, %cst_15 [1] : vector<8x8x4xf32> to vector<8x4xf32>
    %18 = vector.shape_cast %17 : vector<8x4xf32> to vector<8x1x4xf32>
    %19 = vector.shape_cast %16 : vector<1x4xf32> to vector<1x1x4xf32>
    %20 = vector.broadcast %19 : vector<1x1x4xf32> to vector<8x1x4xf32>
    %21 = arith.maximumf %18, %20 : vector<8x1x4xf32>
    %22 = vector.shape_cast %16 : vector<1x4xf32> to vector<1x1x4xf32>
    %23 = vector.broadcast %22 : vector<1x1x4xf32> to vector<8x1x4xf32>
    %24 = arith.subf %23, %21 : vector<8x1x4xf32>
    %25 = math.exp %24 : vector<8x1x4xf32>
    %26 = vector.broadcast %21 : vector<8x1x4xf32> to vector<8x8x4xf32>
    %27 = arith.subf %15, %26 : vector<8x8x4xf32>
    %28 = math.exp %27 : vector<8x8x4xf32>
    %cst_16 = arith.constant dense<0.000000e+00> : vector<8x4xf32>
    %29 = vector.multi_reduction <add>, %28, %cst_16 [1] : vector<8x8x4xf32> to vector<8x4xf32>
    %30 = vector.shape_cast %29 : vector<8x4xf32> to vector<8x1x4xf32>
    %31 = arith.addf %25, %30 : vector<8x1x4xf32>
    %32 = tpu.reciprocal %31 {approx = true} : vector<8x1x4xf32> -> vector<8x1x4xf32>
    %33 = arith.mulf %25, %32 : vector<8x1x4xf32>
    %34 = vector.broadcast %32 : vector<8x1x4xf32> to vector<8x8x4xf32>
    %35 = arith.mulf %28, %34 : vector<8x8x4xf32>
    %36 = vector.shape_cast %35 : vector<8x8x4xf32> to vector<64x4xf32>
    %c0_17 = arith.constant 0 : index
    %c0_18 = arith.constant 0 : index
    %37 = vector.load %arg9[%c0_17, %c0_18] : memref<4x32xf32, #tpu.memory_space<vmem>>, vector<4x32xf32>
    %cst_19 = arith.constant dense<0.000000e+00> : vector<64x32xf32>
    %38 = tpu.matmul %36, %37, %cst_19 {dimension_numbers = #tpu.dot_dimension_numbers<[1], [0], [0], [1], [0, 0, 1, 1], [], []>} : vector<64x4xf32>, vector<4x32xf32>, vector<64x32xf32> -> vector<64x32xf32>
    %39 = arith.mulf %38, %9 : vector<64x32xf32>
    %40 = vector.shape_cast %39 : vector<64x32xf32> to vector<8x8x32xf32>
    %cst_20 = arith.constant dense<0.000000e+00> : vector<8x32xf32>
    %41 = vector.multi_reduction <add>, %40, %cst_20 [1] : vector<8x8x32xf32> to vector<8x32xf32>
    %42 = vector.shape_cast %33 : vector<8x1x4xf32> to vector<8x4xf32>
    %c0_21 = arith.constant 0 : index
    %c0_22 = arith.constant 0 : index
    %43 = vector.load %arg9[%c0_21, %c0_22] : memref<4x32xf32, #tpu.memory_space<vmem>>, vector<4x32xf32>
    %cst_23 = arith.constant dense<0.000000e+00> : vector<8x32xf32>
    %44 = tpu.matmul %42, %43, %cst_23 {dimension_numbers = #tpu.dot_dimension_numbers<[1], [0], [0], [1], [0, 0, 1, 1], [], []>} : vector<8x4xf32>, vector<4x32xf32>, vector<8x32xf32> -> vector<8x32xf32>
    %c0_24 = arith.constant 0 : index
    %c0_25 = arith.constant 0 : index
    %45 = vector.load %arg8[%c0_24, %c0_25] : memref<1x32xf32, #tpu.memory_space<vmem>>, vector<1x32xf32>
    %46 = vector.broadcast %45 : vector<1x32xf32> to vector<8x32xf32>
    %47 = arith.mulf %44, %46 : vector<8x32xf32>
    %48 = arith.addf %41, %47 : vector<8x32xf32>
    %c0_26 = arith.constant 0 : index
    %c0_27 = arith.constant 0 : index
    %49 = vector.load %arg10[%c0_26, %c0_27] : memref<8x32xf32, #tpu.memory_space<vmem>>, vector<8x32xf32>
    tpu.vector_store %arg10[%c0_26, %c0_27], %48 {strides = array<i32>} : memref<8x32xf32, #tpu.memory_space<vmem>>, vector<8x32xf32>,
    return
  }
  func.func @transform_0(%arg0: i32) -> (i32, i32, i32) {
    %c0_i32 = arith.constant 0 : i32
    %c0_i32_0 = arith.constant 0 : i32
    %c0_i32_1 = arith.constant 0 : i32
    return %arg0, %c0_i32, %c0_i32_0 : i32, i32, i32
  }
  func.func @transform_1(%arg0: i32) -> (i32, i32) {
    %c0_i32 = arith.constant 0 : i32
    %c0_i32_0 = arith.constant 0 : i32
    %c0_i32_1 = arith.constant 0 : i32
    return %c0_i32, %c0_i32_0 : i32, i32
  }
  func.func @transform_2(%arg0: i32) -> (i32, i32) {
    %c0_i32 = arith.constant 0 : i32
    %c0_i32_0 = arith.constant 0 : i32
    %c0_i32_1 = arith.constant 0 : i32
    return %c0_i32, %c0_i32_0 : i32, i32
  }
  func.func @transform_3(%arg0: i32) -> (i32, i32) {
    %c0_i32 = arith.constant 0 : i32
    %c0_i32_0 = arith.constant 0 : i32
    %c0_i32_1 = arith.constant 0 : i32
    return %c0_i32, %c0_i32_0 : i32, i32
  }
  func.func @transform_4(%arg0: i32) -> (i32, i32) {
    %c0_i32 = arith.constant 0 : i32
    %c0_i32_0 = arith.constant 0 : i32
    %c0_i32_1 = arith.constant 0 : i32
    return %c0_i32, %c0_i32_0 : i32, i32
  }
  func.func @transform_5(%arg0: i32) -> (i32, i32) {
    %c0_i32 = arith.constant 0 : i32
    %c0_i32_0 = arith.constant 0 : i32
    %c0_i32_1 = arith.constant 0 : i32
    return %c0_i32, %c0_i32_0 : i32, i32
  }
  func.func @transform_6(%arg0: i32) -> (i32, i32) {
    %c0_i32 = arith.constant 0 : i32
    %c0_i32_0 = arith.constant 0 : i32
    %c0_i32_1 = arith.constant 0 : i32
    return %c0_i32, %c0_i32_0 : i32, i32
  }
  func.func @transform_7(%arg0: i32) -> (i32, i32) {
    %c0_i32 = arith.constant 0 : i32
    %c0_i32_0 = arith.constant 0 : i32
    %c0_i32_1 = arith.constant 0 : i32
    return %c0_i32, %c0_i32_0 : i32, i32
  }
  func.func @transform_8(%arg0: i32) -> (i32, i32) {
    %c0_i32 = arith.constant 0 : i32
    %c0_i32_0 = arith.constant 0 : i32
    %c0_i32_1 = arith.constant 0 : i32
    return %c0_i32, %c0_i32_0 : i32, i32
  }
  func.func @transform_9(%arg0: i32) -> (i32, i32) {
    %c0_i32 = arith.constant 0 : i32
    %c0_i32_0 = arith.constant 0 : i32
    return %arg0, %c0_i32 : i32, i32
  }
}

</mosaic_0001>

<llo_original>
// kernel: tpu_custom_call.1
$region0: #{tpu_custom_call.1}
  #allocation0 [shape = 'u32[]', space=smem, size = 0x4, offset = 0x4, fixed_abs, tag = 'smem constant byte address 0x4 - core index']
  #allocation1 [shape = 'u32[144,128]{1,0:T(1,128)}', space=vmem, size = 0x12000, scoped, tag = 'internal scratch']
  %s0 = inlined_call_operand.hbm [shape: f32[16,8,32], index: 0, kind: input, shape index: {}]
  %s1 = inlined_call_operand.vmem [shape: f32[1,32], index: 1, kind: input, shape index: {}]
  %s2 = inlined_call_operand.vmem [shape: f32[32,32], index: 2, kind: input, shape index: {}]
  %s3 = inlined_call_operand.vmem [shape: f32[1,32], index: 3, kind: input, shape index: {}]
  %s4 = inlined_call_operand.vmem [shape: f32[32,4], index: 4, kind: input, shape index: {}]
  %s5 = inlined_call_operand.vmem [shape: f32[1,4], index: 5, kind: input, shape index: {}]
  %s6 = inlined_call_operand.vmem [shape: f32[1,4], index: 6, kind: input, shape index: {}]
  %s7 = inlined_call_operand.vmem [shape: f32[1,32], index: 7, kind: input, shape index: {}]
  %s8 = inlined_call_operand.vmem [shape: f32[4,32], index: 8, kind: input, shape index: {}]
  %s9 = inlined_call_operand.hbm [shape: f32[16,32], index: 9, kind: output, shape index: {}]
  %s10 = sld [smem:[#allocation0]]
  $region73: #{tpu_custom_call.1} parent=0
    _
  %s12 = ssub.s32 1, %s10
  %s13 = scalar_select 0, %s12, %s10
  $region1: #{tpu_custom_call.1} parent=0
    #allocation2 [shape = 'u8[65536]{0}', space=vmem, size = 0x10000, scoped, tag = 'input window, operand 0']
    #allocation3 [shape = 's32[2]{0}', space=sflag, size = 0x8, scoped, tag = 'scoped memory for tpu_custom_call.1']
    #allocation4 [shape = 's32[2]{0}', space=sflag, size = 0x8, scoped, tag = 'scoped memory for tpu_custom_call.1']
    #allocation5 [shape = 'u8[8192]{0}', space=vmem, size = 0x2000, scoped, tag = 'output window, operand 0']
    %14 = vsyncpa [#allocation3], 0
    %s15 = scalar_lea.sflag [#allocation3], 1
    %16 = vsyncpa %s15, 0
    %17 = vsyncpa [#allocation4], 0
    %s18 = scalar_lea.sflag [#allocation4], 1
    %19 = vsyncpa %s18, 0
    loop: start=0, step=1, limit=4
    $region2: #{tpu_custom_call.1} parent=1 // loop_pre_header
      _
    $region3: #{tpu_custom_call.1} parent=1 // loop_header
      %s21 = sphi 0, %s25
      %p22 = scmp.ge.s32.totalorder %s21, 4
      %s31 = sphi 0, %s33
      %s34 = sphi 0, %s31
      %s35 = sphi 0, %s34
      %s51 = sphi 0, %s35
      %s55 = sphi 0, %s55
      %s57 = sphi 0, %s55
      %s58 = sphi 0, %s57
      %s72 = sphi 0, %s58
      %s76 = sphi 0, %s76
      %s78 = sphi 0, %s76
      %s79 = sphi 0, %s78
      %s93 = sphi 0, %s79
      %s97 = sphi 0, %s97
      %s99 = sphi 0, %s97
      %s100 = sphi 0, %s99
      %s114 = sphi 0, %s100
      %s118 = sphi 0, %s118
      %s120 = sphi 0, %s118
      %s121 = sphi 0, %s120
      %s135 = sphi 0, %s121
      %s139 = sphi 0, %s139
      %s141 = sphi 0, %s139
      %s142 = sphi 0, %s141
      %s156 = sphi 0, %s142
      %s160 = sphi 0, %s160
      %s162 = sphi 0, %s160
      %s163 = sphi 0, %s162
      %s177 = sphi 0, %s163
      %s181 = sphi 0, %s181
      %s183 = sphi 0, %s181
      %s184 = sphi 0, %s183
      %s198 = sphi 0, %s184
      %s202 = sphi 0, %s202
      %s204 = sphi 0, %s202
      %s205 = sphi 0, %s204
      %s219 = sphi 0, %s205
      %s225 = sphi 0, %s227
      %s228 = sphi 0, %s225
      %s229 = sphi 0, %s228
      %s245 = sphi 0, %s229
    $region4: #{tpu_custom_call.1} parent=1 // loop_header_branch
      %24 = sbr.rel (%p22) target = $region8
    $region5: #{tpu_custom_call.1} parent=1 // loop_body
      %s26 = ssub.s32 %s21, 1
      %s27 = ssub.s32 %s21, 2
      %s28 = sadd.s32 %s21, 1
      %s29 = ssub.s32 %s21, %s28
      %p30 = scmp.eq.s32.totalorder %s29, 0
      %s32 = sadd.s32 %s31, 1
      %s33 = scalar_select %p30, %s31, %s32
      %p36 = pneg %p30
      %p37 = scmp.eq.s32.totalorder %s21, 1
      %p38 = por %p36, %p37
      %p39 = scmp.ne.s32.totalorder %s31, %s34
      %p40 = scmp.eq.s32.totalorder %s21, 0
      %p41 = por %p39, %p40
      %p42 = scmp.ne.s32.totalorder %s31, %s34
      %p43 = scmp.eq.s32.totalorder %s26, 1
      %p44 = por %p42, %p43
      %p45 = scmp.ne.s32.totalorder %s34, %s35
      %p46 = scmp.eq.s32.totalorder %s26, 0
      %p47 = por %p45, %p46
      %p48 = scmp.ne.s32.totalorder %s34, %s35
      %p49 = scmp.eq.s32.totalorder %s27, 1
      %p50 = por %p48, %p49
      %p52 = scmp.ne.s32.totalorder %s35, %s51
      %p53 = scmp.eq.s32.totalorder %s27, 0
      %p54 = por %p52, %p53
      %s56 = sadd.s32 %s55, 1
      %p59 = scmp.eq.s32.totalorder %s21, 1
      %p60 = scmp.ne.s32.totalorder %s55, %s57
      %p61 = scmp.eq.s32.totalorder %s21, 0
      %p62 = por %p60, %p61
      %p63 = scmp.ne.s32.totalorder %s55, %s57
      %p64 = scmp.eq.s32.totalorder %s26, 1
      %p65 = por %p63, %p64
      %p66 = scmp.ne.s32.totalorder %s57, %s58
      %p67 = scmp.eq.s32.totalorder %s26, 0
      %p68 = por %p66, %p67
      %p69 = scmp.ne.s32.totalorder %s57, %s58
      %p70 = scmp.eq.s32.totalorder %s27, 1
      %p71 = por %p69, %p70
      %p73 = scmp.ne.s32.totalorder %s58, %s72
      %p74 = scmp.eq.s32.totalorder %s27, 0
      %p75 = por %p73, %p74
      %s77 = sadd.s32 %s76, 1
      %p80 = scmp.eq.s32.totalorder %s21, 1
      %p81 = scmp.ne.s32.totalorder %s76, %s78
      %p82 = scmp.eq.s32.totalorder %s21, 0
      %p83 = por %p81, %p82
      %p84 = scmp.ne.s32.totalorder %s76, %s78
      %p85 = scmp.eq.s32.totalorder %s26, 1
      %p86 = por %p84, %p85
      %p87 = scmp.ne.s32.totalorder %s78, %s79
      %p88 = scmp.eq.s32.totalorder %s26, 0
      %p89 = por %p87, %p88
      %p90 = scmp.ne.s32.totalorder %s78, %s79
      %p91 = scmp.eq.s32.totalorder %s27, 1
      %p92 = por %p90, %p91
      %p94 = scmp.ne.s32.totalorder %s79, %s93
      %p95 = scmp.eq.s32.totalorder %s27, 0
      %p96 = por %p94, %p95
      %s98 = sadd.s32 %s97, 1
      %p101 = scmp.eq.s32.totalorder %s21, 1
      %p102 = scmp.ne.s32.totalorder %s97, %s99
      %p103 = scmp.eq.s32.totalorder %s21, 0
      %p104 = por %p102, %p103
      %p105 = scmp.ne.s32.totalorder %s97, %s99
      %p106 = scmp.eq.s32.totalorder %s26, 1
      %p107 = por %p105, %p106
      %p108 = scmp.ne.s32.totalorder %s99, %s100
      %p109 = scmp.eq.s32.totalorder %s26, 0
      %p110 = por %p108, %p109
      %p111 = scmp.ne.s32.totalorder %s99, %s100
      %p112 = scmp.eq.s32.totalorder %s27, 1
      %p113 = por %p111, %p112
      %p115 = scmp.ne.s32.totalorder %s100, %s114
      %p116 = scmp.eq.s32.totalorder %s27, 0
      %p117 = por %p115, %p116
      %s119 = sadd.s32 %s118, 1
      %p122 = scmp.eq.s32.totalorder %s21, 1
      %p123 = scmp.ne.s32.totalorder %s118, %s120
      %p124 = scmp.eq.s32.totalorder %s21, 0
      %p125 = por %p123, %p124
      %p126 = scmp.ne.s32.totalorder %s118, %s120
      %p127 = scmp.eq.s32.totalorder %s26, 1
      %p128 = por %p126, %p127
      %p129 = scmp.ne.s32.totalorder %s120, %s121
      %p130 = scmp.eq.s32.totalorder %s26, 0
      %p131 = por %p129, %p130
      %p132 = scmp.ne.s32.totalorder %s120, %s121
      %p133 = scmp.eq.s32.totalorder %s27, 1
      %p134 = por %p132, %p133
      %p136 = scmp.ne.s32.totalorder %s121, %s135
      %p137 = scmp.eq.s32.totalorder %s27, 0
      %p138 = por %p136, %p137
      %s140 = sadd.s32 %s139, 1
      %p143 = scmp.eq.s32.totalorder %s21, 1
      %p144 = scmp.ne.s32.totalorder %s139, %s141
      %p145 = scmp.eq.s32.totalorder %s21, 0
      %p146 = por %p144, %p145
      %p147 = scmp.ne.s32.totalorder %s139, %s141
      %p148 = scmp.eq.s32.totalorder %s26, 1
      %p149 = por %p147, %p148
      %p150 = scmp.ne.s32.totalorder %s141, %s142
      %p151 = scmp.eq.s32.totalorder %s26, 0
      %p152 = por %p150, %p151
      %p153 = scmp.ne.s32.totalorder %s141, %s142
      %p154 = scmp.eq.s32.totalorder %s27, 1
      %p155 = por %p153, %p154
      %p157 = scmp.ne.s32.totalorder %s142, %s156
      %p158 = scmp.eq.s32.totalorder %s27, 0
      %p159 = por %p157, %p158
      %s161 = sadd.s32 %s160, 1
      %p164 = scmp.eq.s32.totalorder %s21, 1
      %p165 = scmp.ne.s32.totalorder %s160, %s162
      %p166 = scmp.eq.s32.totalorder %s21, 0
      %p167 = por %p165, %p166
      %p168 = scmp.ne.s32.totalorder %s160, %s162
      %p169 = scmp.eq.s32.totalorder %s26, 1
      %p170 = por %p168, %p169
      %p171 = scmp.ne.s32.totalorder %s162, %s163
      %p172 = scmp.eq.s32.totalorder %s26, 0
      %p173 = por %p171, %p172
      %p174 = scmp.ne.s32.totalorder %s162, %s163
      %p175 = scmp.eq.s32.totalorder %s27, 1
      %p176 = por %p174, %p175
      %p178 = scmp.ne.s32.totalorder %s163, %s177
      %p179 = scmp.eq.s32.totalorder %s27, 0
      %p180 = por %p178, %p179
      %s182 = sadd.s32 %s181, 1
      %p185 = scmp.eq.s32.totalorder %s21, 1
      %p186 = scmp.ne.s32.totalorder %s181, %s183
      %p187 = scmp.eq.s32.totalorder %s21, 0
      %p188 = por %p186, %p187
      %p189 = scmp.ne.s32.totalorder %s181, %s183
      %p190 = scmp.eq.s32.totalorder %s26, 1
      %p191 = por %p189, %p190
      %p192 = scmp.ne.s32.totalorder %s183, %s184
      %p193 = scmp.eq.s32.totalorder %s26, 0
      %p194 = por %p192, %p193
      %p195 = scmp.ne.s32.totalorder %s183, %s184
      %p196 = scmp.eq.s32.totalorder %s27, 1
      %p197 = por %p195, %p196
      %p199 = scmp.ne.s32.totalorder %s184, %s198
      %p200 = scmp.eq.s32.totalorder %s27, 0
      %p201 = por %p199, %p200
      %s203 = sadd.s32 %s202, 1
      %p206 = scmp.eq.s32.totalorder %s21, 1
      %p207 = scmp.ne.s32.totalorder %s202, %s204
      %p208 = scmp.eq.s32.totalorder %s21, 0
      %p209 = por %p207, %p208
      %p210 = scmp.ne.s32.totalorder %s202, %s204
      %p211 = scmp.eq.s32.totalorder %s26, 1
      %p212 = por %p210, %p211
      %p213 = scmp.ne.s32.totalorder %s204, %s205
      %p214 = scmp.eq.s32.totalorder %s26, 0
      %p215 = por %p213, %p214
      %p216 = scmp.ne.s32.totalorder %s204, %s205
      %p217 = scmp.eq.s32.totalorder %s27, 1
      %p218 = por %p216, %p217
      %p220 = scmp.ne.s32.totalorder %s205, %s219
      %p221 = scmp.eq.s32.totalorder %s27, 0
      %p222 = por %p220, %p221
      %s223 = ssub.s32 %s21, %s28
      %p224 = scmp.eq.s32.totalorder %s223, 0
      %s226 = sadd.s32 %s225, 1
      %s227 = scalar_select %p224, %s225, %s226
      %p230 = pneg %p224
      %p231 = scmp.eq.s32.totalorder %s21, 1
      %p232 = por %p230, %p231
      %p233 = scmp.ne.s32.totalorder %s225, %s228
      %p234 = scmp.eq.s32.totalorder %s21, 0
      %p235 = por %p233, %p234
      %p236 = scmp.ne.s32.totalorder %s225, %s228
      %p237 = scmp.eq.s32.totalorder %s26, 1
      %p238 = por %p236, %p237
      %p239 = scmp.ne.s32.totalorder %s228, %s229
      %p240 = scmp.eq.s32.totalorder %s26, 0
      %p241 = por %p239, %p240
      %p242 = scmp.ne.s32.totalorder %s228, %s229
      %p243 = scmp.eq.s32.totalorder %s27, 1
      %p244 = por %p242, %p243
      %p246 = scmp.ne.s32.totalorder %s229, %s245
      %p247 = scmp.eq.s32.totalorder %s27, 0
      %p248 = por %p246, %p247
      %p249 = scmp.le.s32.totalorder 1, %s21
      %p250 = scmp.lt.s32.totalorder %s21, 3
      %p251 = pnand %p249, %p250
      %p252 = pneg %p251
      // Predicated region
      $region9: #{tpu_custom_call.1} parent=5 // pred_check
        _
      $region10: #{tpu_custom_call.1} parent=5 // pred_check_branch
        %254 = sbr.rel (%p251) target = $region12
      $region11: #{tpu_custom_call.1} parent=5 // pred_region
        %s255 = ssub.s32 %s21, 1
        // Predicated region
        $region13: #{tpu_custom_call.1} parent=11 // pred_check
          %p256 = pneg %p68
        $region14: #{tpu_custom_call.1} parent=11 // pred_check_branch
          %258 = sbr.rel (%p256) target = $region16
        $region15: #{tpu_custom_call.1} parent=11 // pred_region
          _
        $region16: #{tpu_custom_call.1} parent=11 // pred_fallthru
          _
        // Predicated region
        $region17: #{tpu_custom_call.1} parent=11 // pred_check
          %p259 = pneg %p89
        $region18: #{tpu_custom_call.1} parent=11 // pred_check_branch
          %261 = sbr.rel (%p259) target = $region20
        $region19: #{tpu_custom_call.1} parent=11 // pred_region
          _
        $region20: #{tpu_custom_call.1} parent=11 // pred_fallthru
          _
        // Predicated region
        $region21: #{tpu_custom_call.1} parent=11 // pred_check
          %p262 = pneg %p110
        $region22: #{tpu_custom_call.1} parent=11 // pred_check_branch
          %264 = sbr.rel (%p262) target = $region24
        $region23: #{tpu_custom_call.1} parent=11 // pred_region
          _
        $region24: #{tpu_custom_call.1} parent=11 // pred_fallthru
          _
        // Predicated region
        $region25: #{tpu_custom_call.1} parent=11 // pred_check
          %p265 = pneg %p131
        $region26: #{tpu_custom_call.1} parent=11 // pred_check_branch
          %267 = sbr.rel (%p265) target = $region28
        $region27: #{tpu_custom_call.1} parent=11 // pred_region
          _
        $region28: #{tpu_custom_call.1} parent=11 // pred_fallthru
          _
        // Predicated region
        $region29: #{tpu_custom_call.1} parent=11 // pred_check
          %p268 = pneg %p152
        $region30: #{tpu_custom_call.1} parent=11 // pred_check_branch
          %270 = sbr.rel (%p268) target = $region32
        $region31: #{tpu_custom_call.1} parent=11 // pred_region
          _
        $region32: #{tpu_custom_call.1} parent=11 // pred_fallthru
          _
        // Predicated region
        $region33: #{tpu_custom_call.1} parent=11 // pred_check
          %p271 = pneg %p173
        $region34: #{tpu_custom_call.1} parent=11 // pred_check_branch
          %273 = sbr.rel (%p271) target = $region36
        $region35: #{tpu_custom_call.1} parent=11 // pred_region
          _
        $region36: #{tpu_custom_call.1} parent=11 // pred_fallthru
          _
        // Predicated region
        $region37: #{tpu_custom_call.1} parent=11 // pred_check
          %p274 = pneg %p194
        $region38: #{tpu_custom_call.1} parent=11 // pred_check_branch
          %276 = sbr.rel (%p274) target = $region40
        $region39: #{tpu_custom_call.1} parent=11 // pred_region
          _
        $region40: #{tpu_custom_call.1} parent=11 // pred_fallthru
          _
        // Predicated region
        $region41: #{tpu_custom_call.1} parent=11 // pred_check
          %p277 = pneg %p215
        $region42: #{tpu_custom_call.1} parent=11 // pred_check_branch
          %279 = sbr.rel (%p277) target = $region44
        $region43: #{tpu_custom_call.1} parent=11 // pred_region
          _
        $region44: #{tpu_custom_call.1} parent=11 // pred_fallthru
          _
      $region12: #{tpu_custom_call.1} parent=5 // pred_fallthru
        _
      %p280 = scmp.lt.s32.totalorder %s21, 2
      // Predicated region
      $region45: #{tpu_custom_call.1} parent=5 // pred_check
        %p281 = pneg %p280
      $region46: #{tpu_custom_call.1} parent=5 // pred_check_branch
        %283 = sbr.rel (%p281) target = $region48
      $region47: #{tpu_custom_call.1} parent=5 // pred_region
        // Predicated region
        $region49: #{tpu_custom_call.1} parent=47 // pred_check
          %p284 = pneg %p41
        $region50: #{tpu_custom_call.1} parent=47 // pred_check_branch
          %286 = sbr.rel (%p284) target = $region52
        $region51: #{tpu_custom_call.1} parent=47 // pred_region
          %s287 = sand.u32 %s31, 1
          %s288 = scalar_lea.sflag [#allocation3], %s287
          %s289 = sand.u32 %s31, 1
          %s290 = smul.addr %s289, 64
          %s291 = scalar_lea.vmem [#allocation2], %s290
          %s292 = smul.u32 8, %s21
          %s294 = ssub.s32 1024, 1024
          %295 = vsyncadd %s288, %s294
          %s296 = smul.addr %s292, 128
          %s297 = scalar_lea.hbm %s0, %s296
          %s298 = sshll.u32 %s291, 4
          %s299 = int_to_ptr.vmem [resolvable:$true] %s298
          %304 = dma.hbm_to_vmem [thread:$0]  %s297, 1024, %s299, %s288, 128, 128, 8
        $region52: #{tpu_custom_call.1} parent=47 // pred_fallthru
          _
      $region48: #{tpu_custom_call.1} parent=5 // pred_fallthru
        _
      %p305 = scmp.le.s32.totalorder 1, %s21
      %p306 = scmp.lt.s32.totalorder %s21, 3
      %p307 = pnand %p305, %p306
      %p308 = pneg %p307
      // Predicated region
      $region53: #{tpu_custom_call.1} parent=5 // pred_check
        _
      $region54: #{tpu_custom_call.1} parent=5 // pred_check_branch
        %310 = sbr.rel (%p307) target = $region56
      $region55: #{tpu_custom_call.1} parent=5 // pred_region
        %s311 = ssub.s32 %s21, 1
        %s312 = sand.u32 %s34, 1
        %s313 = scalar_lea.sflag [#allocation3], %s312
        %s314 = sand.u32 %s34, 1
        %s315 = smul.addr %s314, 64
        %s316 = scalar_lea.vmem [#allocation2], %s315
        // Predicated region
        $region57: #{tpu_custom_call.1} parent=55 // pred_check
          %p317 = pneg %p47
        $region58: #{tpu_custom_call.1} parent=55 // pred_check_branch
          %319 = sbr.rel (%p317) target = $region60
        $region59: #{tpu_custom_call.1} parent=55 // pred_region
          %320 = dma.done %s313, 1024
        $region60: #{tpu_custom_call.1} parent=55 // pred_fallthru
          _
        %s321 = sand.u32 %s34, 1
        %s322 = scalar_lea.sflag [#allocation3], %s321
        %s323 = sand.u32 %s34, 1
        %s324 = smul.addr %s323, 64
        %s325 = scalar_lea.vmem [#allocation2], %s324
        %p326 = pneg %p47
        %p327 = pneg %p44
        %p328 = pneg %p68
        %p329 = pneg %p65
        %p330 = pneg %p89
        %p331 = pneg %p86
        %p332 = pneg %p110
        %p333 = pneg %p107
        %p334 = pneg %p131
        %p335 = pneg %p128
        %p336 = pneg %p152
        %p337 = pneg %p149
        %p338 = pneg %p173
        %p339 = pneg %p170
        %p340 = pneg %p194
        %p341 = pneg %p191
        %p342 = pneg %p215
        %p343 = pneg %p212
        %p344 = pneg %p241
        %p345 = pneg %p238
        %s346 = sand.u32 %s228, 1
        %s347 = scalar_lea.sflag [#allocation4], %s346
        %s348 = sand.u32 %s228, 1
        %s349 = smul.addr %s348, 8
        %s350 = scalar_lea.vmem [#allocation5], %s349
        %s351 = smul.u32 8, %s26
        %v352 = vld [vmem:[%s316] sm:$0xff]
        %v353 = vld [vmem:[%s316 + $0x8] sm:$0xff]
        %v354 = vld [vmem:[%s316 + $0x10] sm:$0xff]
        %v355 = vld [vmem:[%s316 + $0x18] sm:$0xff]
        %v356 = vld [vmem:[%s316 + $0x20] sm:$0xff]
        %v357 = vld [vmem:[%s316 + $0x28] sm:$0xff]
        %v358 = vld [vmem:[%s316 + $0x30] sm:$0xff]
        %v359 = vld [vmem:[%s316 + $0x38] sm:$0xff]
        %v360 = vld [vmem:[%s1] sm:$0x1]
        %v362 = vlaneseq
        %v363 = vshrl.u32 %v362, 7
        %v364 = vsub.s32 0, %v363
        %v365 = vrot.slane %v360, %v364
        %v367 = vadd.f32 %v352, %v365
        %v368 = vadd.f32 %v353, %v365
        %v369 = vadd.f32 %v354, %v365
        %v370 = vadd.f32 %v355, %v365
        %v371 = vadd.f32 %v356, %v365
        %v372 = vadd.f32 %v357, %v365
        %v373 = vadd.f32 %v358, %v365
        %v374 = vadd.f32 %v359, %v365
        %v375 = vld [vmem:[%s2] sm:$0xff]
        %v376 = vld [vmem:[%s2 + $0x8] sm:$0xff]
        %v377 = vld [vmem:[%s2 + $0x10] sm:$0xff]
        %v378 = vld [vmem:[%s2 + $0x18] sm:$0xff]
        %v379 = vld [vmem:[%s3] sm:$0x1]
        %v381 = vlaneseq
        %v382 = vshrl.u32 %v381, 7
        %v383 = vsub.s32 0, %v382
        %v384 = vrot.slane %v379, %v383
        %vm386 = vcmask 261120
        %v388 = vsel %vm386, %v367, 0
        %v391 = vsel %vm386, %v368, 0
        %v394 = vsel %vm386, %v369, 0
        %v397 = vsel %vm386, %v370, 0
        %v400 = vsel %vm386, %v371, 0
        %v403 = vsel %vm386, %v372, 0
        %v406 = vsel %vm386, %v373, 0
        %v409 = vsel %vm386, %v374, 0
        %411 = vmatprep.subr.mxu0 0.0
        %412 = vmatpush1.msra.mxu0 %v375
        %413 = vmatprep.subr.mxu0 0.0
        %414 = vmatpush1.msra.mxu0 %v376
        %415 = vmatprep.subr.mxu0 0.0
        %416 = vmatpush1.msra.mxu0 %v377
        %417 = vmatprep.subr.mxu0 0.0
        %418 = vmatpush1.msra.mxu0 %v378
        %419 = vmatprep.subr.mxu0 0.0
        %420 = vmatpush1.msra.mxu0 0.0
        %421 = vmatprep.subr.mxu0 0.0
        %422 = vmatpush1.msra.mxu0 0.0
        %423 = vmatprep.subr.mxu0 0.0
        %424 = vmatpush1.msra.mxu0 0.0
        %425 = vmatprep.subr.mxu0 0.0
        %426 = vmatpush1.msra.mxu0 0.0
        %427 = vmatprep.subr.mxu0 0.0
        %428 = vmatpush1.msra.mxu0 0.0
        %429 = vmatprep.subr.mxu0 0.0
        %430 = vmatpush1.msra.mxu0 0.0
        %431 = vmatprep.subr.mxu0 0.0
        %432 = vmatpush1.msra.mxu0 0.0
        %433 = vmatprep.subr.mxu0 0.0
        %434 = vmatpush1.msra.mxu0 0.0
        %435 = vmatprep.subr.mxu0 0.0
        %436 = vmatpush1.msra.mxu0 0.0
        %437 = vmatprep.subr.mxu0 0.0
        %438 = vmatpush1.msra.mxu0 0.0
        %439 = vmatprep.subr.mxu0 0.0
        %440 = vmatpush1.msra.mxu0 0.0
        %441 = vmatprep.subr.mxu0 0.0
        %442 = vmatpush1.msra.mxu0 0.0
        %443 = vmatprep.subr.mxu0 0.0
        %444 = vmatpush1.msra.mxu0 0.0
        %445 = vmatprep.subr.mxu0 0.0
        %446 = vmatpush1.msra.mxu0 0.0
        %447 = vmatprep.subr.mxu0 0.0
        %448 = vmatpush1.msra.mxu0 0.0
        %449 = vmatprep.subr.mxu0 0.0
        %450 = vmatpush1.msra.mxu0 0.0
        %451 = vmatprep.subr.mxu0 0.0
        %452 = vmatpush1.msra.mxu0 0.0
        %453 = vmatprep.subr.mxu0 0.0
        %454 = vmatpush1.msra.mxu0 0.0
        %455 = vmatprep.subr.mxu0 0.0
        %456 = vmatpush1.msra.mxu0 0.0
        %457 = vmatprep.subr.mxu0 0.0
        %458 = vmatpush1.msra.mxu0 0.0
        %459 = vmatprep.subr.mxu0 0.0
        %460 = vmatpush1.msra.mxu0 0.0
        %461 = vmatprep.subr.mxu0 0.0
        %462 = vmatpush1.msra.mxu0 0.0
        %463 = vmatprep.subr.mxu0 0.0
        %464 = vmatpush1.msra.mxu0 0.0
        %465 = vmatprep.subr.mxu0 0.0
        %466 = vmatpush1.msra.mxu0 0.0
        %467 = vmatprep.subr.mxu0 0.0
        %468 = vmatpush1.msra.mxu0 0.0
        %469 = vmatprep.subr.mxu0 0.0
        %470 = vmatpush1.msra.mxu0 0.0
        %471 = vmatprep.subr.mxu0 0.0
        %472 = vmatpush1.msra.mxu0 0.0
        %473 = vmatprep.subr.mxu0 0.0
        %474 = vmatpush1.msra.mxu0 0.0
        %475 = vmatprep.mubr.f32.mxu0 0.0
        %476 = vmatmul.mubr.f32.gmra.mrb[0].mxu0 %v388
        %v477 = vpop.f32.mrb[0].mxu0
        %v478 = vadd.f32 %v384, %v477
        %v479 = vpop.f32.mrb[0].mxu0
        %480 = vmatprep.mubr.f32.mxu0 0.0
        %481 = vmatmul.mubr.f32.gmra.mrb[0].mxu0 %v391
        %v482 = vpop.f32.mrb[0].mxu0
        %v483 = vadd.f32 %v384, %v482
        %v484 = vpop.f32.mrb[0].mxu0
        %485 = vmatprep.mubr.f32.mxu0 0.0
        %486 = vmatmul.mubr.f32.gmra.mrb[0].mxu0 %v394
        %v487 = vpop.f32.mrb[0].mxu0
        %v488 = vadd.f32 %v384, %v487
        %v489 = vpop.f32.mrb[0].mxu0
        %490 = vmatprep.mubr.f32.mxu0 0.0
        %491 = vmatmul.mubr.f32.gmra.mrb[0].mxu0 %v397
        %v492 = vpop.f32.mrb[0].mxu0
        %v493 = vadd.f32 %v384, %v492
        %v494 = vpop.f32.mrb[0].mxu0
        %495 = vmatprep.mubr.f32.mxu0 0.0
        %496 = vmatmul.mubr.f32.gmra.mrb[0].mxu0 %v400
        %v497 = vpop.f32.mrb[0].mxu0
        %v498 = vadd.f32 %v384, %v497
        %v499 = vpop.f32.mrb[0].mxu0
        %500 = vmatprep.mubr.f32.mxu0 0.0
        %501 = vmatmul.mubr.f32.gmra.mrb[0].mxu0 %v403
        %v502 = vpop.f32.mrb[0].mxu0
        %v503 = vadd.f32 %v384, %v502
        %v504 = vpop.f32.mrb[0].mxu0
        %505 = vmatprep.mubr.f32.mxu0 0.0
        %506 = vmatmul.mubr.f32.gmra.mrb[0].mxu0 %v406
        %v507 = vpop.f32.mrb[0].mxu0
        %v508 = vadd.f32 %v384, %v507
        %v509 = vpop.f32.mrb[0].mxu0
        %510 = vmatprep.mubr.f32.mxu0 0.0
        %511 = vmatmul.mubr.f32.gmra.mrb[0].mxu0 %v409
        %v512 = vpop.f32.mrb[0].mxu0
        %v513 = vadd.f32 %v384, %v512
        %v514 = vpop.f32.mrb[0].mxu0
        %515 = vdwg.mxu0
        %v516 = vld [vmem:[%s4] sm:$0xff]
        %v517 = vld [vmem:[%s4 + $0x8] sm:$0xff]
        %v518 = vld [vmem:[%s4 + $0x10] sm:$0xff]
        %v519 = vld [vmem:[%s4 + $0x18] sm:$0xff]
        %v520 = vld [vmem:[%s5] sm:$0x1]
        %v522 = vlaneseq
        %v523 = vshrl.u32 %v522, 7
        %v524 = vsub.s32 0, %v523
        %v525 = vrot.slane %v520, %v524
        %527 = vmatprep.subr.mxu0 0.0
        %528 = vmatpush1.msra.mxu0 %v516
        %529 = vmatprep.subr.mxu0 0.0
        %530 = vmatpush1.msra.mxu0 %v517
        %531 = vmatprep.subr.mxu0 0.0
        %532 = vmatpush1.msra.mxu0 %v518
        %533 = vmatprep.subr.mxu0 0.0
        %534 = vmatpush1.msra.mxu0 %v519
        %535 = vmatprep.subr.mxu0 0.0
        %536 = vmatpush1.msra.mxu0 0.0
        %537 = vmatprep.subr.mxu0 0.0
        %538 = vmatpush1.msra.mxu0 0.0
        %539 = vmatprep.subr.mxu0 0.0
        %540 = vmatpush1.msra.mxu0 0.0
        %541 = vmatprep.subr.mxu0 0.0
        %542 = vmatpush1.msra.mxu0 0.0
        %543 = vmatprep.subr.mxu0 0.0
        %544 = vmatpush1.msra.mxu0 0.0
        %545 = vmatprep.subr.mxu0 0.0
        %546 = vmatpush1.msra.mxu0 0.0
        %547 = vmatprep.subr.mxu0 0.0
        %548 = vmatpush1.msra.mxu0 0.0
        %549 = vmatprep.subr.mxu0 0.0
        %550 = vmatpush1.msra.mxu0 0.0
        %551 = vmatprep.subr.mxu0 0.0
        %552 = vmatpush1.msra.mxu0 0.0
        %553 = vmatprep.subr.mxu0 0.0
        %554 = vmatpush1.msra.mxu0 0.0
        %555 = vmatprep.subr.mxu0 0.0
        %556 = vmatpush1.msra.mxu0 0.0
        %557 = vmatprep.subr.mxu0 0.0
        %558 = vmatpush1.msra.mxu0 0.0
        %559 = vmatprep.subr.mxu0 0.0
        %560 = vmatpush1.msra.mxu0 0.0
        %561 = vmatprep.subr.mxu0 0.0
        %562 = vmatpush1.msra.mxu0 0.0
        %563 = vmatprep.subr.mxu0 0.0
        %564 = vmatpush1.msra.mxu0 0.0
        %565 = vmatprep.subr.mxu0 0.0
        %566 = vmatpush1.msra.mxu0 0.0
        %567 = vmatprep.subr.mxu0 0.0
        %568 = vmatpush1.msra.mxu0 0.0
        %569 = vmatprep.subr.mxu0 0.0
        %570 = vmatpush1.msra.mxu0 0.0
        %571 = vmatprep.subr.mxu0 0.0
        %572 = vmatpush1.msra.mxu0 0.0
        %573 = vmatprep.subr.mxu0 0.0
        %574 = vmatpush1.msra.mxu0 0.0
        %575 = vmatprep.subr.mxu0 0.0
        %576 = vmatpush1.msra.mxu0 0.0
        %577 = vmatprep.subr.mxu0 0.0
        %578 = vmatpush1.msra.mxu0 0.0
        %579 = vmatprep.subr.mxu0 0.0
        %580 = vmatpush1.msra.mxu0 0.0
        %581 = vmatprep.subr.mxu0 0.0
        %582 = vmatpush1.msra.mxu0 0.0
        %583 = vmatprep.subr.mxu0 0.0
        %584 = vmatpush1.msra.mxu0 0.0
        %585 = vmatprep.subr.mxu0 0.0
        %586 = vmatpush1.msra.mxu0 0.0
        %587 = vmatprep.subr.mxu0 0.0
        %588 = vmatpush1.msra.mxu0 0.0
        %589 = vmatprep.subr.mxu0 0.0
        %590 = vmatpush1.msra.mxu0 0.0
        %591 = vmatprep.mubr.f32.mxu0 0.0
        %592 = vmatmul.mubr.f32.gmra.mrb[0].mxu0 %v388
        %v593 = vpop.f32.mrb[0].mxu0
        %v594 = vadd.f32 %v525, %v593
        %v595 = vpop.f32.mrb[0].mxu0
        %596 = vmatprep.mubr.f32.mxu0 0.0
        %597 = vmatmul.mubr.f32.gmra.mrb[0].mxu0 %v391
        %v598 = vpop.f32.mrb[0].mxu0
        %v599 = vadd.f32 %v525, %v598
        %v600 = vpop.f32.mrb[0].mxu0
        %601 = vmatprep.mubr.f32.mxu0 0.0
        %602 = vmatmul.mubr.f32.gmra.mrb[0].mxu0 %v394
        %v603 = vpop.f32.mrb[0].mxu0
        %v604 = vadd.f32 %v525, %v603
        %v605 = vpop.f32.mrb[0].mxu0
        %606 = vmatprep.mubr.f32.mxu0 0.0
        %607 = vmatmul.mubr.f32.gmra.mrb[0].mxu0 %v397
        %v608 = vpop.f32.mrb[0].mxu0
        %v609 = vadd.f32 %v525, %v608
        %v610 = vpop.f32.mrb[0].mxu0
        %611 = vmatprep.mubr.f32.mxu0 0.0
        %612 = vmatmul.mubr.f32.gmra.mrb[0].mxu0 %v400
        %v613 = vpop.f32.mrb[0].mxu0
        %v614 = vadd.f32 %v525, %v613
        %v615 = vpop.f32.mrb[0].mxu0
        %616 = vmatprep.mubr.f32.mxu0 0.0
        %617 = vmatmul.mubr.f32.gmra.mrb[0].mxu0 %v403
        %v618 = vpop.f32.mrb[0].mxu0
        %v619 = vadd.f32 %v525, %v618
        %v620 = vpop.f32.mrb[0].mxu0
        %621 = vmatprep.mubr.f32.mxu0 0.0
        %622 = vmatmul.mubr.f32.gmra.mrb[0].mxu0 %v406
        %v623 = vpop.f32.mrb[0].mxu0
        %v624 = vadd.f32 %v525, %v623
        %v625 = vpop.f32.mrb[0].mxu0
        %626 = vmatprep.mubr.f32.mxu0 0.0
        %627 = vmatmul.mubr.f32.gmra.mrb[0].mxu0 %v409
        %v628 = vpop.f32.mrb[0].mxu0
        %v629 = vadd.f32 %v525, %v628
        %v630 = vpop.f32.mrb[0].mxu0
        %631 = vdwg.mxu0
        %v632 = vld [vmem:[%s6] sm:$0x1]
        %vm633 = vcmask 31744
        %v634 = vsel %vm633, %v594, -inf
        %v635 = vrot.slane %v634, 4
        %v636 = vmax.f32 %v634, %v635
        %v637 = vrot.slane %v636, 2
        %v638 = vmax.f32 %v636, %v637
        %v639 = vrot.slane %v638, 1
        %v640 = vmax.f32 %v638, %v639
        %v641 = vsel %vm633, %v599, -inf
        %v642 = vrot.slane %v641, 4
        %v643 = vmax.f32 %v641, %v642
        %v644 = vrot.slane %v643, 2
        %v645 = vmax.f32 %v643, %v644
        %v646 = vrot.slane %v645, 1
        %v647 = vmax.f32 %v645, %v646
        %v648 = vsel %vm633, %v604, -inf
        %v649 = vrot.slane %v648, 4
        %v650 = vmax.f32 %v648, %v649
        %v651 = vrot.slane %v650, 2
        %v652 = vmax.f32 %v650, %v651
        %v653 = vrot.slane %v652, 1
        %v654 = vmax.f32 %v652, %v653
        %v655 = vsel %vm633, %v609, -inf
        %v656 = vrot.slane %v655, 4
        %v657 = vmax.f32 %v655, %v656
        %v658 = vrot.slane %v657, 2
        %v659 = vmax.f32 %v657, %v658
        %v660 = vrot.slane %v659, 1
        %v661 = vmax.f32 %v659, %v660
        %v662 = vsel %vm633, %v614, -inf
        %v663 = vrot.slane %v662, 4
        %v664 = vmax.f32 %v662, %v663
        %v665 = vrot.slane %v664, 2
        %v666 = vmax.f32 %v664, %v665
        %v667 = vrot.slane %v666, 1
        %v668 = vmax.f32 %v666, %v667
        %v669 = vsel %vm633, %v619, -inf
        %v670 = vrot.slane %v669, 4
        %v671 = vmax.f32 %v669, %v670
        %v672 = vrot.slane %v671, 2
        %v673 = vmax.f32 %v671, %v672
        %v674 = vrot.slane %v673, 1
        %v675 = vmax.f32 %v673, %v674
        %v676 = vsel %vm633, %v624, -inf
        %v677 = vrot.slane %v676, 4
        %v678 = vmax.f32 %v676, %v677
        %v679 = vrot.slane %v678, 2
        %v680 = vmax.f32 %v678, %v679
        %v681 = vrot.slane %v680, 1
        %v682 = vmax.f32 %v680, %v681
        %v683 = vsel %vm633, %v629, -inf
        %v684 = vrot.slane %v683, 4
        %v685 = vmax.f32 %v683, %v684
        %v686 = vrot.slane %v685, 2
        %v687 = vmax.f32 %v685, %v686
        %v688 = vrot.slane %v687, 1
        %v689 = vmax.f32 %v687, %v688
        %v690 = vmax.f32 %v640, %v632
        %v691 = vmax.f32 %v647, %v632
        %v692 = vmax.f32 %v654, %v632
        %v693 = vmax.f32 %v661, %v632
        %v694 = vmax.f32 %v668, %v632
        %v695 = vmax.f32 %v675, %v632
        %v696 = vmax.f32 %v682, %v632
        %v697 = vmax.f32 %v689, %v632
        %v698 = vsub.f32 %v632, %v690
        %v699 = vsub.f32 %v632, %v691
        %v700 = vsub.f32 %v632, %v692
        %v701 = vsub.f32 %v632, %v693
        %v702 = vsub.f32 %v632, %v694
        %v703 = vsub.f32 %v632, %v695
        %v704 = vsub.f32 %v632, %v696
        %v705 = vsub.f32 %v632, %v697
        %v706 = vmul.f32 %v698, 1.442695
        %v707 = vpow.pop %v706
        %v708 = vmul.f32 %v699, 1.442695
        %v709 = vpow.pop %v708
        %v710 = vmul.f32 %v700, 1.442695
        %v711 = vpow.pop %v710
        %v712 = vmul.f32 %v701, 1.442695
        %v713 = vpow.pop %v712
        %v714 = vmul.f32 %v702, 1.442695
        %v715 = vpow.pop %v714
        %v716 = vmul.f32 %v703, 1.442695
        %v717 = vpow.pop %v716
        %v718 = vmul.f32 %v704, 1.442695
        %v719 = vpow.pop %v718
        %v720 = vmul.f32 %v705, 1.442695
        %v721 = vpow.pop %v720
        %v722 = vlaneseq
        %v723 = vshrl.u32 %v722, 7
        %v724 = vsub.s32 0, %v723
        %v725 = vrot.slane %v690, %v724
        %v726 = vlaneseq
        %v727 = vshrl.u32 %v726, 7
        %v728 = vsub.s32 0, %v727
        %v729 = vrot.slane %v691, %v728
        %v730 = vlaneseq
        %v731 = vshrl.u32 %v730, 7
        %v732 = vsub.s32 0, %v731
        %v733 = vrot.slane %v692, %v732
        %v734 = vlaneseq
        %v735 = vshrl.u32 %v734, 7
        %v736 = vsub.s32 0, %v735
        %v737 = vrot.slane %v693, %v736
        %v738 = vlaneseq
        %v739 = vshrl.u32 %v738, 7
        %v740 = vsub.s32 0, %v739
        %v741 = vrot.slane %v694, %v740
        %v742 = vlaneseq
        %v743 = vshrl.u32 %v742, 7
        %v744 = vsub.s32 0, %v743
        %v745 = vrot.slane %v695, %v744
        %v746 = vlaneseq
        %v747 = vshrl.u32 %v746, 7
        %v748 = vsub.s32 0, %v747
        %v749 = vrot.slane %v696, %v748
        %v750 = vlaneseq
        %v751 = vshrl.u32 %v750, 7
        %v752 = vsub.s32 0, %v751
        %v753 = vrot.slane %v697, %v752
        %v754 = vsub.f32 %v594, %v725
        %v755 = vsub.f32 %v599, %v729
        %v756 = vsub.f32 %v604, %v733
        %v757 = vsub.f32 %v609, %v737
        %v758 = vsub.f32 %v614, %v741
        %v759 = vsub.f32 %v619, %v745
        %v760 = vsub.f32 %v624, %v749
        %v761 = vsub.f32 %v629, %v753
        %v762 = vmul.f32 %v754, 1.442695
        %v763 = vpow.pop %v762
        %v764 = vmul.f32 %v755, 1.442695
        %v765 = vpow.pop %v764
        %v766 = vmul.f32 %v756, 1.442695
        %v767 = vpow.pop %v766
        %v768 = vmul.f32 %v757, 1.442695
        %v769 = vpow.pop %v768
        %v770 = vmul.f32 %v758, 1.442695
        %v771 = vpow.pop %v770
        %v772 = vmul.f32 %v759, 1.442695
        %v773 = vpow.pop %v772
        %v774 = vmul.f32 %v760, 1.442695
        %v775 = vpow.pop %v774
        %v776 = vmul.f32 %v761, 1.442695
        %v777 = vpow.pop %v776
        %v778 = vsel %vm633, %v763, 0.0
        %v779 = vrot.slane %v778, 4
        %v780 = vadd.f32 %v778, %v779
        %v781 = vrot.slane %v780, 2
        %v782 = vadd.f32 %v780, %v781
        %v783 = vrot.slane %v782, 1
        %v784 = vadd.f32 %v782, %v783
        %v785 = vsel %vm633, %v765, 0.0
        %v786 = vrot.slane %v785, 4
        %v787 = vadd.f32 %v785, %v786
        %v788 = vrot.slane %v787, 2
        %v789 = vadd.f32 %v787, %v788
        %v790 = vrot.slane %v789, 1
        %v791 = vadd.f32 %v789, %v790
        %v792 = vsel %vm633, %v767, 0.0
        %v793 = vrot.slane %v792, 4
        %v794 = vadd.f32 %v792, %v793
        %v795 = vrot.slane %v794, 2
        %v796 = vadd.f32 %v794, %v795
        %v797 = vrot.slane %v796, 1
        %v798 = vadd.f32 %v796, %v797
        %v799 = vsel %vm633, %v769, 0.0
        %v800 = vrot.slane %v799, 4
        %v801 = vadd.f32 %v799, %v800
        %v802 = vrot.slane %v801, 2
        %v803 = vadd.f32 %v801, %v802
        %v804 = vrot.slane %v803, 1
        %v805 = vadd.f32 %v803, %v804
        %v806 = vsel %vm633, %v771, 0.0
        %v807 = vrot.slane %v806, 4
        %v808 = vadd.f32 %v806, %v807
        %v809 = vrot.slane %v808, 2
        %v810 = vadd.f32 %v808, %v809
        %v811 = vrot.slane %v810, 1
        %v812 = vadd.f32 %v810, %v811
        %v813 = vsel %vm633, %v773, 0.0
        %v814 = vrot.slane %v813, 4
        %v815 = vadd.f32 %v813, %v814
        %v816 = vrot.slane %v815, 2
        %v817 = vadd.f32 %v815, %v816
        %v818 = vrot.slane %v817, 1
        %v819 = vadd.f32 %v817, %v818
        %v820 = vsel %vm633, %v775, 0.0
        %v821 = vrot.slane %v820, 4
        %v822 = vadd.f32 %v820, %v821
        %v823 = vrot.slane %v822, 2
        %v824 = vadd.f32 %v822, %v823
        %v825 = vrot.slane %v824, 1
        %v826 = vadd.f32 %v824, %v825
        %v827 = vsel %vm633, %v777, 0.0
        %v828 = vrot.slane %v827, 4
        %v829 = vadd.f32 %v827, %v828
        %v830 = vrot.slane %v829, 2
        %v831 = vadd.f32 %v829, %v830
        %v832 = vrot.slane %v831, 1
        %v833 = vadd.f32 %v831, %v832
        %v834 = vadd.f32 %v707, %v784
        %v835 = vadd.f32 %v709, %v791
        %v836 = vadd.f32 %v711, %v798
        %v837 = vadd.f32 %v713, %v805
        %v838 = vadd.f32 %v715, %v812
        %v839 = vadd.f32 %v717, %v819
        %v840 = vadd.f32 %v719, %v826
        %v841 = vadd.f32 %v721, %v833
        %v842 = vrcp.pop %v834
        %v843 = vrcp.pop %v835
        %v844 = vrcp.pop %v836
        %v845 = vrcp.pop %v837
        %v846 = vrcp.pop %v838
        %v847 = vrcp.pop %v839
        %v848 = vrcp.pop %v840
        %v849 = vrcp.pop %v841
        %v850 = vmul.f32 %v707, %v842
        %v851 = vmul.f32 %v709, %v843
        %v852 = vmul.f32 %v711, %v844
        %v853 = vmul.f32 %v713, %v845
        %v854 = vmul.f32 %v715, %v846
        %v855 = vmul.f32 %v717, %v847
        %v856 = vmul.f32 %v719, %v848
        %v857 = vmul.f32 %v721, %v849
        %v866 = vlaneseq
        %v867 = vshrl.u32 %v866, 7
        %v868 = vsub.s32 0, %v867
        %v869 = vrot.slane %v842, %v868
        %v870 = vlaneseq
        %v871 = vshrl.u32 %v870, 7
        %v872 = vsub.s32 0, %v871
        %v873 = vrot.slane %v843, %v872
        %v874 = vlaneseq
        %v875 = vshrl.u32 %v874, 7
        %v876 = vsub.s32 0, %v875
        %v877 = vrot.slane %v844, %v876
        %v878 = vlaneseq
        %v879 = vshrl.u32 %v878, 7
        %v880 = vsub.s32 0, %v879
        %v881 = vrot.slane %v845, %v880
        %v882 = vlaneseq
        %v883 = vshrl.u32 %v882, 7
        %v884 = vsub.s32 0, %v883
        %v885 = vrot.slane %v846, %v884
        %v886 = vlaneseq
        %v887 = vshrl.u32 %v886, 7
        %v888 = vsub.s32 0, %v887
        %v889 = vrot.slane %v847, %v888
        %v890 = vlaneseq
        %v891 = vshrl.u32 %v890, 7
        %v892 = vsub.s32 0, %v891
        %v893 = vrot.slane %v848, %v892
        %v894 = vlaneseq
        %v895 = vshrl.u32 %v894, 7
        %v896 = vsub.s32 0, %v895
        %v897 = vrot.slane %v849, %v896
        %v906 = vmul.f32 %v763, %v869
        %v907 = vmul.f32 %v765, %v873
        %v908 = vmul.f32 %v767, %v877
        %v909 = vmul.f32 %v769, %v881
        %v910 = vmul.f32 %v771, %v885
        %v911 = vmul.f32 %v773, %v889
        %v912 = vmul.f32 %v775, %v893
        %v913 = vmul.f32 %v777, %v897
        %v914 = vld [vmem:[%s8] sm:$0xf]
        %v916 = vsel %vm633, %v906, 0
        %v919 = vsel %vm633, %v907, 0
        %v922 = vsel %vm633, %v908, 0
        %v925 = vsel %vm633, %v909, 0
        %v928 = vsel %vm633, %v910, 0
        %v931 = vsel %vm633, %v911, 0
        %v934 = vsel %vm633, %v912, 0
        %v937 = vsel %vm633, %v913, 0
        %vm939 = vcmask 1043456
        %v941 = vsel %vm939, %v914, 0
        %943 = vmatprep.subr.mxu0 0.0
        %944 = vmatpush1.msra.mxu0 %v941
        %945 = vmatprep.subr.mxu0 0.0
        %946 = vmatpush1.msra.mxu0 0.0
        %947 = vmatprep.subr.mxu0 0.0
        %948 = vmatpush1.msra.mxu0 0.0
        %949 = vmatprep.subr.mxu0 0.0
        %950 = vmatpush1.msra.mxu0 0.0
        %951 = vmatprep.subr.mxu0 0.0
        %952 = vmatpush1.msra.mxu0 0.0
        %953 = vmatprep.subr.mxu0 0.0
        %954 = vmatpush1.msra.mxu0 0.0
        %955 = vmatprep.subr.mxu0 0.0
        %956 = vmatpush1.msra.mxu0 0.0
        %957 = vmatprep.subr.mxu0 0.0
        %958 = vmatpush1.msra.mxu0 0.0
        %959 = vmatprep.subr.mxu0 0.0
        %960 = vmatpush1.msra.mxu0 0.0
        %961 = vmatprep.subr.mxu0 0.0
        %962 = vmatpush1.msra.mxu0 0.0
        %963 = vmatprep.subr.mxu0 0.0
        %964 = vmatpush1.msra.mxu0 0.0
        %965 = vmatprep.subr.mxu0 0.0
        %966 = vmatpush1.msra.mxu0 0.0
        %967 = vmatprep.subr.mxu0 0.0
        %968 = vmatpush1.msra.mxu0 0.0
        %969 = vmatprep.subr.mxu0 0.0
        %970 = vmatpush1.msra.mxu0 0.0
        %971 = vmatprep.subr.mxu0 0.0
        %972 = vmatpush1.msra.mxu0 0.0
        %973 = vmatprep.subr.mxu0 0.0
        %974 = vmatpush1.msra.mxu0 0.0
        %975 = vmatprep.subr.mxu0 0.0
        %976 = vmatpush1.msra.mxu0 0.0
        %977 = vmatprep.subr.mxu0 0.0
        %978 = vmatpush1.msra.mxu0 0.0
        %979 = vmatprep.subr.mxu0 0.0
        %980 = vmatpush1.msra.mxu0 0.0
        %981 = vmatprep.subr.mxu0 0.0
        %982 = vmatpush1.msra.mxu0 0.0
        %983 = vmatprep.subr.mxu0 0.0
        %984 = vmatpush1.msra.mxu0 0.0
        %985 = vmatprep.subr.mxu0 0.0
        %986 = vmatpush1.msra.mxu0 0.0
        %987 = vmatprep.subr.mxu0 0.0
        %988 = vmatpush1.msra.mxu0 0.0
        %989 = vmatprep.subr.mxu0 0.0
        %990 = vmatpush1.msra.mxu0 0.0
        %991 = vmatprep.subr.mxu0 0.0
        %992 = vmatpush1.msra.mxu0 0.0
        %993 = vmatprep.subr.mxu0 0.0
        %994 = vmatpush1.msra.mxu0 0.0
        %995 = vmatprep.subr.mxu0 0.0
        %996 = vmatpush1.msra.mxu0 0.0
        %997 = vmatprep.subr.mxu0 0.0
        %998 = vmatpush1.msra.mxu0 0.0
        %999 = vmatprep.subr.mxu0 0.0
        %1000 = vmatpush1.msra.mxu0 0.0
        %1001 = vmatprep.subr.mxu0 0.0
        %1002 = vmatpush1.msra.mxu0 0.0
        %1003 = vmatprep.subr.mxu0 0.0
        %1004 = vmatpush1.msra.mxu0 0.0
        %1005 = vmatprep.subr.mxu0 0.0
        %1006 = vmatpush1.msra.mxu0 0.0
        %1007 = vmatprep.mubr.f32.mxu0 0.0
        %1008 = vmatmul.mubr.f32.gmra.mrb[0].mxu0 %v916
        %v1009 = vpop.f32.mrb[0].mxu0
        %v1010 = vadd.f32 0.0, %v1009
        %v1011 = vpop.f32.mrb[0].mxu0
        %1012 = vmatprep.mubr.f32.mxu0 0.0
        %1013 = vmatmul.mubr.f32.gmra.mrb[0].mxu0 %v919
        %v1014 = vpop.f32.mrb[0].mxu0
        %v1015 = vadd.f32 0.0, %v1014
        %v1016 = vpop.f32.mrb[0].mxu0
        %1017 = vmatprep.mubr.f32.mxu0 0.0
        %1018 = vmatmul.mubr.f32.gmra.mrb[0].mxu0 %v922
        %v1019 = vpop.f32.mrb[0].mxu0
        %v1020 = vadd.f32 0.0, %v1019
        %v1021 = vpop.f32.mrb[0].mxu0
        %1022 = vmatprep.mubr.f32.mxu0 0.0
        %1023 = vmatmul.mubr.f32.gmra.mrb[0].mxu0 %v925
        %v1024 = vpop.f32.mrb[0].mxu0
        %v1025 = vadd.f32 0.0, %v1024
        %v1026 = vpop.f32.mrb[0].mxu0
        %1027 = vmatprep.mubr.f32.mxu0 0.0
        %1028 = vmatmul.mubr.f32.gmra.mrb[0].mxu0 %v928
        %v1029 = vpop.f32.mrb[0].mxu0
        %v1030 = vadd.f32 0.0, %v1029
        %v1031 = vpop.f32.mrb[0].mxu0
        %1032 = vmatprep.mubr.f32.mxu0 0.0
        %1033 = vmatmul.mubr.f32.gmra.mrb[0].mxu0 %v931
        %v1034 = vpop.f32.mrb[0].mxu0
        %v1035 = vadd.f32 0.0, %v1034
        %v1036 = vpop.f32.mrb[0].mxu0
        %1037 = vmatprep.mubr.f32.mxu0 0.0
        %1038 = vmatmul.mubr.f32.gmra.mrb[0].mxu0 %v934
        %v1039 = vpop.f32.mrb[0].mxu0
        %v1040 = vadd.f32 0.0, %v1039
        %v1041 = vpop.f32.mrb[0].mxu0
        %1042 = vmatprep.mubr.f32.mxu0 0.0
        %1043 = vmatmul.mubr.f32.gmra.mrb[0].mxu0 %v937
        %v1044 = vpop.f32.mrb[0].mxu0
        %v1045 = vadd.f32 0.0, %v1044
        %v1046 = vpop.f32.mrb[0].mxu0
        %1047 = vdwg.mxu0
        %v1048 = vmul.f32 %v1010, %v478
        %v1049 = vmul.f32 %v1015, %v483
        %v1050 = vmul.f32 %v1020, %v488
        %v1051 = vmul.f32 %v1025, %v493
        %v1052 = vmul.f32 %v1030, %v498
        %v1053 = vmul.f32 %v1035, %v503
        %v1054 = vmul.f32 %v1040, %v508
        %v1055 = vmul.f32 %v1045, %v513
        %v1056 = vsel %vm386, %v1048, 0.0
        %v1057 = vrot.slane %v1056, 4
        %v1058 = vadd.f32 %v1056, %v1057
        %v1059 = vrot.slane %v1058, 2
        %v1060 = vadd.f32 %v1058, %v1059
        %v1061 = vrot.slane %v1060, 1
        %v1062 = vadd.f32 %v1060, %v1061
        %v1063 = vsel %vm386, %v1049, 0.0
        %v1064 = vrot.slane %v1063, 4
        %v1065 = vadd.f32 %v1063, %v1064
        %v1066 = vrot.slane %v1065, 2
        %v1067 = vadd.f32 %v1065, %v1066
        %v1068 = vrot.slane %v1067, 1
        %v1069 = vadd.f32 %v1067, %v1068
        %v1070 = vsel %vm386, %v1050, 0.0
        %v1071 = vrot.slane %v1070, 4
        %v1072 = vadd.f32 %v1070, %v1071
        %v1073 = vrot.slane %v1072, 2
        %v1074 = vadd.f32 %v1072, %v1073
        %v1075 = vrot.slane %v1074, 1
        %v1076 = vadd.f32 %v1074, %v1075
        %v1077 = vsel %vm386, %v1051, 0.0
        %v1078 = vrot.slane %v1077, 4
        %v1079 = vadd.f32 %v1077, %v1078
        %v1080 = vrot.slane %v1079, 2
        %v1081 = vadd.f32 %v1079, %v1080
        %v1082 = vrot.slane %v1081, 1
        %v1083 = vadd.f32 %v1081, %v1082
        %v1084 = vsel %vm386, %v1052, 0.0
        %v1085 = vrot.slane %v1084, 4
        %v1086 = vadd.f32 %v1084, %v1085
        %v1087 = vrot.slane %v1086, 2
        %v1088 = vadd.f32 %v1086, %v1087
        %v1089 = vrot.slane %v1088, 1
        %v1090 = vadd.f32 %v1088, %v1089
        %v1091 = vsel %vm386, %v1053, 0.0
        %v1092 = vrot.slane %v1091, 4
        %v1093 = vadd.f32 %v1091, %v1092
        %v1094 = vrot.slane %v1093, 2
        %v1095 = vadd.f32 %v1093, %v1094
        %v1096 = vrot.slane %v1095, 1
        %v1097 = vadd.f32 %v1095, %v1096
        %v1098 = vsel %vm386, %v1054, 0.0
        %v1099 = vrot.slane %v1098, 4
        %v1100 = vadd.f32 %v1098, %v1099
        %v1101 = vrot.slane %v1100, 2
        %v1102 = vadd.f32 %v1100, %v1101
        %v1103 = vrot.slane %v1102, 1
        %v1104 = vadd.f32 %v1102, %v1103
        %v1105 = vsel %vm386, %v1055, 0.0
        %v1106 = vrot.slane %v1105, 4
        %v1107 = vadd.f32 %v1105, %v1106
        %v1108 = vrot.slane %v1107, 2
        %v1109 = vadd.f32 %v1107, %v1108
        %v1110 = vrot.slane %v1109, 1
        %v1111 = vadd.f32 %v1109, %v1110
        %v1120 = vcombine.low %v850, %v851
        %v1121 = vcombine.low %v852, %v853
        %v1122 = vcombine.low %v854, %v855
        %v1123 = vcombine.low %v856, %v857
        %v1125 = vunpack.c.l.s4 1966171168
        %v1126 = vunpack.c.0.s8 %v1125
        %v1127 = vlaneseq
        %v1128 = vshrl.u32 %v1127, 7
        %v1129 = vsub.s32 %v1126, %v1128
        %v1130 = vrot.slane %v1120, %v1129
        %v1132 = vunpack.c.l.s4 1966171168
        %v1133 = vunpack.c.0.s8 %v1132
        %v1134 = vlaneseq
        %v1135 = vshrl.u32 %v1134, 7
        %v1136 = vsub.s32 %v1133, %v1135
        %v1137 = vrot.slane %v1121, %v1136
        %v1139 = vunpack.c.l.s4 1966171168
        %v1140 = vunpack.c.0.s8 %v1139
        %v1141 = vlaneseq
        %v1142 = vshrl.u32 %v1141, 7
        %v1143 = vsub.s32 %v1140, %v1142
        %v1144 = vrot.slane %v1122, %v1143
        %v1146 = vunpack.c.l.s4 1966171168
        %v1147 = vunpack.c.0.s8 %v1146
        %v1148 = vlaneseq
        %v1149 = vshrl.u32 %v1148, 7
        %v1150 = vsub.s32 %v1147, %v1149
        %v1151 = vrot.slane %v1123, %v1150
        %v1152 = vcombine.low %v1130, %v1137
        %v1153 = vcombine.low %v1144, %v1151
        %v1155 = vunpack.c.l.s4 1966171168
        %v1156 = vunpack.c.0.s8 %v1155
        %v1157 = vlaneseq
        %v1158 = vshrl.u32 %v1157, 7
        %v1159 = vsub.s32 %v1156, %v1158
        %v1160 = vrot.slane %v1152, %v1159
        %v1162 = vunpack.c.l.s4 1966171168
        %v1163 = vunpack.c.0.s8 %v1162
        %v1164 = vlaneseq
        %v1165 = vshrl.u32 %v1164, 7
        %v1166 = vsub.s32 %v1163, %v1165
        %v1167 = vrot.slane %v1153, %v1166
        %v1168 = vcombine.low %v1160, %v1167
        %v1169 = vsel %vm633, %v1168, 0
        %1171 = vmatprep.subr.mxu0 0.0
        %1172 = vmatpush1.msra.mxu0 %v941
        %1173 = vmatprep.subr.mxu0 0.0
        %1174 = vmatpush1.msra.mxu0 0.0
        %1175 = vmatprep.subr.mxu0 0.0
        %1176 = vmatpush1.msra.mxu0 0.0
        %1177 = vmatprep.subr.mxu0 0.0
        %1178 = vmatpush1.msra.mxu0 0.0
        %1179 = vmatprep.subr.mxu0 0.0
        %1180 = vmatpush1.msra.mxu0 0.0
        %1181 = vmatprep.subr.mxu0 0.0
        %1182 = vmatpush1.msra.mxu0 0.0
        %1183 = vmatprep.subr.mxu0 0.0
        %1184 = vmatpush1.msra.mxu0 0.0
        %1185 = vmatprep.subr.mxu0 0.0
        %1186 = vmatpush1.msra.mxu0 0.0
        %1187 = vmatprep.subr.mxu0 0.0
        %1188 = vmatpush1.msra.mxu0 0.0
        %1189 = vmatprep.subr.mxu0 0.0
        %1190 = vmatpush1.msra.mxu0 0.0
        %1191 = vmatprep.subr.mxu0 0.0
        %1192 = vmatpush1.msra.mxu0 0.0
        %1193 = vmatprep.subr.mxu0 0.0
        %1194 = vmatpush1.msra.mxu0 0.0
        %1195 = vmatprep.subr.mxu0 0.0
        %1196 = vmatpush1.msra.mxu0 0.0
        %1197 = vmatprep.subr.mxu0 0.0
        %1198 = vmatpush1.msra.mxu0 0.0
        %1199 = vmatprep.subr.mxu0 0.0
        %1200 = vmatpush1.msra.mxu0 0.0
        %1201 = vmatprep.subr.mxu0 0.0
        %1202 = vmatpush1.msra.mxu0 0.0
        %1203 = vmatprep.subr.mxu0 0.0
        %1204 = vmatpush1.msra.mxu0 0.0
        %1205 = vmatprep.subr.mxu0 0.0
        %1206 = vmatpush1.msra.mxu0 0.0
        %1207 = vmatprep.subr.mxu0 0.0
        %1208 = vmatpush1.msra.mxu0 0.0
        %1209 = vmatprep.subr.mxu0 0.0
        %1210 = vmatpush1.msra.mxu0 0.0
        %1211 = vmatprep.subr.mxu0 0.0
        %1212 = vmatpush1.msra.mxu0 0.0
        %1213 = vmatprep.subr.mxu0 0.0
        %1214 = vmatpush1.msra.mxu0 0.0
        %1215 = vmatprep.subr.mxu0 0.0
        %1216 = vmatpush1.msra.mxu0 0.0
        %1217 = vmatprep.subr.mxu0 0.0
        %1218 = vmatpush1.msra.mxu0 0.0
        %1219 = vmatprep.subr.mxu0 0.0
        %1220 = vmatpush1.msra.mxu0 0.0
        %1221 = vmatprep.subr.mxu0 0.0
        %1222 = vmatpush1.msra.mxu0 0.0
        %1223 = vmatprep.subr.mxu0 0.0
        %1224 = vmatpush1.msra.mxu0 0.0
        %1225 = vmatprep.subr.mxu0 0.0
        %1226 = vmatpush1.msra.mxu0 0.0
        %1227 = vmatprep.subr.mxu0 0.0
        %1228 = vmatpush1.msra.mxu0 0.0
        %1229 = vmatprep.subr.mxu0 0.0
        %1230 = vmatpush1.msra.mxu0 0.0
        %1231 = vmatprep.subr.mxu0 0.0
        %1232 = vmatpush1.msra.mxu0 0.0
        %1233 = vmatprep.subr.mxu0 0.0
        %1234 = vmatpush1.msra.mxu0 0.0
        %1235 = vmatprep.mubr.f32.mxu0 0.0
        %1236 = vmatmul.mubr.f32.gmra.mrb[0].mxu0 %v1169
        %v1237 = vpop.f32.mrb[0].mxu0
        %v1238 = vadd.f32 0.0, %v1237
        %v1239 = vpop.f32.mrb[0].mxu0
        %1240 = vdwg.mxu0
        %v1241 = vld [vmem:[%s7] sm:$0x1]
        %v1243 = vlaneseq
        %v1244 = vshrl.u32 %v1243, 7
        %v1245 = vsub.s32 0, %v1244
        %v1246 = vrot.slane %v1241, %v1245
        %v1248 = vmul.f32 %v1238, %v1246
        %v1250 = vrot.slane %v1248, 1
        %v1251 = vrot.slane %v1248, 2
        %v1252 = vrot.slane %v1248, 3
        %v1253 = vrot.slane %v1248, 4
        %v1254 = vrot.slane %v1248, 5
        %v1255 = vrot.slane %v1248, 6
        %v1256 = vrot.slane %v1248, 7
        %v1265 = vadd.f32 %v1062, %v1248
        %v1266 = vadd.f32 %v1069, %v1250
        %v1267 = vadd.f32 %v1076, %v1251
        %v1268 = vadd.f32 %v1083, %v1252
        %v1269 = vadd.f32 %v1090, %v1253
        %v1270 = vadd.f32 %v1097, %v1254
        %v1271 = vadd.f32 %v1104, %v1255
        %v1272 = vadd.f32 %v1111, %v1256
        %v1281 = vrot.slane %v1266, 7
        %vm1282 = vcmask 1041409
        %v1283 = vsel %vm1282, %v1281, %v1265
        %v1284 = vrot.slane %v1267, 6
        %vm1285 = vcmask 1042434
        %v1286 = vsel %vm1285, %v1284, %v1283
        %v1287 = vrot.slane %v1268, 5
        %vm1288 = vcmask 1043459
        %v1289 = vsel %vm1288, %v1287, %v1286
        %v1290 = vrot.slane %v1269, 4
        %vm1291 = vcmask 1044484
        %v1292 = vsel %vm1291, %v1290, %v1289
        %v1293 = vrot.slane %v1270, 3
        %vm1294 = vcmask 1045509
        %v1295 = vsel %vm1294, %v1293, %v1292
        %v1296 = vrot.slane %v1271, 2
        %vm1297 = vcmask 1046534
        %v1298 = vsel %vm1297, %v1296, %v1295
        %v1299 = vrot.slane %v1272, 1
        %vm1300 = vcmask 1047559
        %v1301 = vsel %vm1300, %v1299, %v1298
        %1303 = vst.msk [vmem:[%s350] sm:$0xff] %vm386, %v1301
        %s1304 = sand.u32 %s228, 1
        %s1305 = scalar_lea.sflag [#allocation4], %s1304
        %s1306 = sand.u32 %s228, 1
        %s1307 = smul.addr %s1306, 8
        %s1308 = scalar_lea.vmem [#allocation5], %s1307
        // Predicated region
        $region61: #{tpu_custom_call.1} parent=55 // pred_check
          %p1309 = pneg %p238
        $region62: #{tpu_custom_call.1} parent=55 // pred_check_branch
          %1311 = sbr.rel (%p1309) target = $region64
        $region63: #{tpu_custom_call.1} parent=55 // pred_region
          %s1313 = ssub.s32 128, 128
          %1314 = vsyncadd %s1305, %s1313
          %s1315 = smul.addr %s26, 128
          %s1316 = scalar_lea.hbm %s9, %s1315
          %s1318 = sshll.u32 %s1308, 4
          %s1319 = int_to_ptr.vmem [resolvable:$true] %s1318
          %1321 = dma.vmem_to_hbm [thread:$0]  %s1319, 128, %s1316, %s1305
        $region64: #{tpu_custom_call.1} parent=55 // pred_fallthru
          _
      $region56: #{tpu_custom_call.1} parent=5 // pred_fallthru
        _
      %p1322 = scmp.le.s32.totalorder 2, %s21
      // Predicated region
      $region65: #{tpu_custom_call.1} parent=5 // pred_check
        %p1323 = pneg %p1322
      $region66: #{tpu_custom_call.1} parent=5 // pred_check_branch
        %1325 = sbr.rel (%p1323) target = $region68
      $region67: #{tpu_custom_call.1} parent=5 // pred_region
        %s1326 = ssub.s32 %s21, 2
        // Predicated region
        $region69: #{tpu_custom_call.1} parent=67 // pred_check
          %p1327 = pneg %p244
        $region70: #{tpu_custom_call.1} parent=67 // pred_check_branch
          %1329 = sbr.rel (%p1327) target = $region72
        $region71: #{tpu_custom_call.1} parent=67 // pred_region
          %s1330 = sand.u32 %s229, 1
          %s1331 = scalar_lea.sflag [#allocation4], %s1330
          %s1332 = sand.u32 %s229, 1
          %s1333 = smul.addr %s1332, 8
          %s1334 = scalar_lea.vmem [#allocation5], %s1333
          %1335 = dma.done %s1331, 128
        $region72: #{tpu_custom_call.1} parent=67 // pred_fallthru
          _
      $region68: #{tpu_custom_call.1} parent=5 // pred_fallthru
        _
    $region6: #{tpu_custom_call.1} parent=1 // loop_footer
      %s25 = sadd.s32 1, %s21
    $region7: #{tpu_custom_call.1} parent=1 // loop_footer_branch
      %20 = sbr.rel target = $region3
    $region8: #{tpu_custom_call.1} parent=1 // loop_exit
      _
    %1336 = vsyncpa [#allocation3], 1
    %s1337 = scalar_lea.sflag [#allocation3], 1
    %1338 = vsyncpa %s1337, 1
    %1339 = vsyncpa [#allocation4], 1
    %s1340 = scalar_lea.sflag [#allocation4], 1
    %1341 = vsyncpa %s1340, 1

</llo_original>
